<compile_context>
chip_gen: v7x
topology: tpu7x:2x2x1
jax: 0.10.0
libtpu: 0.0.40
codegen_flags: <defaults>
</compile_context>

<pallas_src>
import functools

import jax
import jax.numpy as jnp
from jax import lax
from jax.experimental import pallas as pl
from jax.experimental.pallas import tpu as pltpu

LEAKY_SLOPE = 0.01   # torch.nn.LeakyReLU default
BN_EPS = 1e-5        # torch.nn.BatchNorm1d default
LANE = 128           # TPU lane width


def _round_up(n, m):
    return (n + m - 1) // m * m


# ----------------------------------------------------------------------------
# Fused kernel: all layers in one pass, activations stay on-chip
# ----------------------------------------------------------------------------
def _fused_mlp_kernel(x_ref, w0_ref, b0_ref, wr_ref, o_ref, *, n_rest, ntargets):
    """x_ref: (tb, nfeat) f32 | w0_ref: (nfeat, D) f32 | b0_ref: (1, D) f32
    wr_ref: (n_rest, D, D) bf16 | o_ref: (tb, ntargets) f32.

    Layer 0:            h = LeakyReLU(x @ W0 + b0)        (b0 also plants the
                                                            constant-1 lane)
    Layers 1..n_rest-1: h = LeakyReLU(h @ Wl)              (bias lives in the
                                                            constant-1 weight row)
    Final layer:        o = (h @ Wf)[:, :ntargets]
    BatchNorm is pre-folded into W/b; Dropout is identity (eval mode).
    """
    # Layer 0: tiny K=nfeat matmul, kept in f32.
    z = jnp.dot(x_ref[...], w0_ref[...],
                preferred_element_type=jnp.float32) + b0_ref[...]
    h = jnp.maximum(z, LEAKY_SLOPE * z)          # LeakyReLU (2 VALU ops/elem)

    # Hidden layers 1..n_rest-1 (static unroll): bf16 MXU matmul, f32 epilogue.
    for l in range(n_rest - 1):
        z = jnp.dot(h.astype(jnp.bfloat16), wr_ref[l],
                    preferred_element_type=jnp.float32)
        h = jnp.maximum(z, LEAKY_SLOPE * z)

    # Final layer (no activation); only the first `ntargets` lanes are real.
    z = jnp.dot(h.astype(jnp.bfloat16), wr_ref[n_rest - 1],
                preferred_element_type=jnp.float32)
    o_ref[...] = z[:, :ntargets].astype(o_ref.dtype)


# ----------------------------------------------------------------------------
# Forward pass: one pallas_call over batch tiles
# ----------------------------------------------------------------------------
@functools.partial(jax.jit, static_argnames=("ntargets", "tile_b"))
def forward(w0, b0, w_rest, x, *, ntargets, tile_b=1024):
    B, nfeat = x.shape
    n_rest = w_rest.shape[0]
    D = w_rest.shape[-1]

    # Sublane-aligned batch tile; keep the grid even when >1 tile (v7x has 2 TCs).
    b8 = _round_up(B, 8)
    tb = _round_up(min(tile_b, b8), 8)
    n_tiles = -(-b8 // tb)
    if n_tiles > 1 and n_tiles % 2 == 1:
        n_tiles += 1
        tb = _round_up(-(-b8 // n_tiles), 8)
    bp = _round_up(b8, tb)
    x_p = jnp.pad(x, ((0, bp - B), (0, 0))) if bp != B else x

    out = pl.pallas_call(
        functools.partial(_fused_mlp_kernel, n_rest=n_rest, ntargets=ntargets),
        out_shape=jax.ShapeDtypeStruct((bp, ntargets), jnp.float32),
        grid=(bp // tb,),
        in_specs=[
            pl.BlockSpec((tb, nfeat), lambda i: (i, 0)),          # x tile (un-padded)
            pl.BlockSpec((nfeat, D), lambda i: (0, 0)),           # first weight (f32)
            pl.BlockSpec((1, D), lambda i: (0, 0)),               # first bias + 1-lane
            pl.BlockSpec((n_rest, D, D), lambda i: (0, 0, 0)),    # bf16 weight stack
        ],
        out_specs=pl.BlockSpec((tb, ntargets), lambda i: (i, 0)),
        compiler_params=pltpu.CompilerParams(
            dimension_semantics=("parallel",)),
    )(x_p, w0, b0, w_rest)

    return out[:B] if bp != B else out


# ----------------------------------------------------------------------------
# Parameter construction (deterministic, mimics nn.Linear / nn.BatchNorm1d init)
# ----------------------------------------------------------------------------
def init_params(key, nfeatures, ntargets, nlayers, hidden_size):
    params = {"hidden": [], "final": None}
    fan_in = nfeatures
    for _ in range(nlayers):
        key, kw, kb, kg, kbt, km, kv = jax.random.split(key, 7)
        bound = 1.0 / jnp.sqrt(fan_in)
        w = jax.random.uniform(kw, (hidden_size, fan_in), jnp.float32, -bound, bound)
        b = jax.random.uniform(kb, (hidden_size,), jnp.float32, -bound, bound)
        gamma = 1.0 + 0.1 * jax.random.normal(kg, (hidden_size,), jnp.float32)
        beta = 0.1 * jax.random.normal(kbt, (hidden_size,), jnp.float32)
        rmean = 0.1 * jax.random.normal(km, (hidden_size,), jnp.float32)
        rvar = 1.0 + 0.1 * jax.random.uniform(kv, (hidden_size,), jnp.float32)
        params["hidden"].append(dict(w=w, b=b, gamma=gamma, beta=beta,
                                     mean=rmean, var=rvar))
        fan_in = hidden_size
    key, kw, kb = jax.random.split(key, 3)
    bound = 1.0 / jnp.sqrt(fan_in)
    wf = jax.random.uniform(kw, (ntargets, fan_in), jnp.float32, -bound, bound)
    bf = jax.random.uniform(kb, (ntargets,), jnp.float32, -bound, bound)
    params["final"] = dict(w=wf, b=bf)
    return params


def prepare_params(params, nfeatures, hidden_size, ntargets, lane=LANE):
    """Fold BN into Linear, transpose to [in,out], pad to the lane width, and fold
    layer >0 biases into a dedicated constant-1 lane.  Done ONCE, outside forward.

    Returns:
      w0:     (nfeatures, D) f32   first-layer weight
      b0:     (1, D)        f32   first-layer bias, with b0[one_lane] = 1
      w_rest: (nlayers, D, D) bf16 hidden layers 1..nlayers-1 + final layer,
                                    bias stored in row `one_lane`
    """
    D = _round_up(max(hidden_size + 1, ntargets), lane)   # reserve the constant lane
    one = D - 1
    nlayers = len(params["hidden"])

    # ---- layer 0: separate weight (f32, tiny) + f32 bias row -------------------
    l0 = params["hidden"][0]
    s0 = l0["gamma"] * lax.rsqrt(l0["var"] + BN_EPS)
    w0_f = (l0["w"] * s0[:, None]).T                       # [nfeat, hidden]
    b0_f = (l0["b"] - l0["mean"]) * s0 + l0["beta"]
    w0 = jnp.zeros((nfeatures, D), jnp.float32).at[:, :hidden_size].set(w0_f)
    b0 = jnp.zeros((1, D), jnp.float32).at[0, :hidden_size].set(b0_f)
    b0 = b0.at[0, one].set(1.0)                            # plant the constant-1 lane

    # ---- hidden layers 1..nlayers-1 + final layer, stacked bf16 ----------------
    ws = []
    for layer in params["hidden"][1:]:
        s = layer["gamma"] * lax.rsqrt(layer["var"] + BN_EPS)
        w = (layer["w"] * s[:, None]).T                    # [hidden, hidden]
        b = (layer["b"] - layer["mean"]) * s + layer["beta"]
        wp = jnp.zeros((D, D), jnp.float32)
        wp = wp.at[:hidden_size, :hidden_size].set(w)
        wp = wp.at[one, :hidden_size].set(b)               # bias via constant-1 lane
        wp = wp.at[one, one].set(1.0)                      # propagate the constant
        ws.append(wp)
    fl = params["final"]
    wp = jnp.zeros((D, D), jnp.float32)
    wp = wp.at[:hidden_size, :ntargets].set(fl["w"].T)
    wp = wp.at[one, :ntargets].set(fl["b"])
    ws.append(wp)
    assert len(ws) == nlayers
    w_rest = jnp.stack(ws).astype(jnp.bfloat16)            # bf16 for the MXU
    return w0, b0, w_rest


# ----------------------------------------------------------------------------
# Pure-JAX f32 reference (un-folded parameters) for a sanity check
# ----------------------------------------------------------------------------
def forward_ref(params, x):
    h = x
    for layer in params["hidden"]:
        z = h @ layer["w"].T + layer["b"]
        z = (z - layer["mean"]) / jnp.sqrt(layer["var"] + BN_EPS) \
            * layer["gamma"] + layer["beta"]
        h = jnp.where(z >= 0, z, LEAKY_SLOPE * z)
    fl = params["final"]
    return h @ fl["w"].T + fl["b"]


if __name__ == "__main__":
    nfeatures, ntargets = 8, 1
    nlayers, hidden_size, dropout = 3, 32, 0.2   # dropout is identity in eval forward
    batch = 16

    key = jax.random.PRNGKey(0)
    key, kx = jax.random.split(key)
    x = jax.random.normal(kx, (batch, nfeatures), jnp.float32)
    params = init_params(key, nfeatures, ntargets, nlayers, hidden_size)

    # One-time parameter prep: BN fold + transpose + pad + bias->const-lane + bf16.
    w0, b0, w_rest = prepare_params(params, nfeatures, hidden_size, ntargets)

    out = forward(w0, b0, w_rest, x, ntargets=ntargets)
    out = jax.block_until_ready(out)

    ref = forward_ref(params, x)
    assert out.shape == (batch, ntargets)
    # bf16 hidden/final weights introduce small drift vs the f32 reference.
    assert jnp.allclose(out, ref, atol=5e-2, rtol=5e-2), (
        f"mismatch vs reference: max abs err {float(jnp.max(jnp.abs(out - ref)))}")

    print("KERNEL_OK")
</pallas_src>

<mosaic_0001>
module attributes {stable_mosaic.version = 11 : i64} {
  func.func @_fused_mlp_kernel(%arg0: i32, %arg1: memref<16x8xf32, #tpu.memory_space<vmem>>, %arg2: memref<8x128xf32, #tpu.memory_space<vmem>>, %arg3: memref<1x128xf32, #tpu.memory_space<vmem>>, %arg4: memref<3x128x128xbf16, #tpu.memory_space<vmem>>, %arg5: memref<16x1xf32, #tpu.memory_space<vmem>>) attributes {dimension_semantics = [#tpu.dimension_semantics<parallel>], iteration_bounds = array<i64: 1>, scalar_prefetch = 0 : i64, scratch_operands = 0 : i64, tpu.core_type = #tpu.core_type<tc>, window_params = [{transform_indices = @transform_0, window_bounds = array<i64: 16, 8>}, {pipeline_mode = #tpu.pipeline_mode<synchronous>, transform_indices = @transform_1, window_bounds = array<i64: 8, 128>}, {pipeline_mode = #tpu.pipeline_mode<synchronous>, transform_indices = @transform_2, window_bounds = array<i64: 1, 128>}, {pipeline_mode = #tpu.pipeline_mode<synchronous>, transform_indices = @transform_3, window_bounds = array<i64: 3, 128, 128>}, {transform_indices = @transform_4, window_bounds = array<i64: 16, 1>}]} {
    %c0 = arith.constant 0 : index
    %c0_0 = arith.constant 0 : index
    %0 = vector.load %arg1[%c0, %c0_0] : memref<16x8xf32, #tpu.memory_space<vmem>>, vector<16x8xf32>
    %c0_1 = arith.constant 0 : index
    %c0_2 = arith.constant 0 : index
    %1 = vector.load %arg2[%c0_1, %c0_2] : memref<8x128xf32, #tpu.memory_space<vmem>>, vector<8x128xf32>
    %cst = arith.constant dense<0.000000e+00> : vector<16x128xf32>
    %2 = tpu.matmul %0, %1, %cst {dimension_numbers = #tpu.dot_dimension_numbers<[1], [0], [0], [1], [0, 0, 1, 1], [], []>} : vector<16x8xf32>, vector<8x128xf32>, vector<16x128xf32> -> vector<16x128xf32>
    %c0_3 = arith.constant 0 : index
    %c0_4 = arith.constant 0 : index
    %3 = vector.load %arg3[%c0_3, %c0_4] : memref<1x128xf32, #tpu.memory_space<vmem>>, vector<1x128xf32>
    %4 = vector.broadcast %3 : vector<1x128xf32> to vector<16x128xf32>
    %5 = arith.addf %2, %4 : vector<16x128xf32>
    %cst_5 = arith.constant 0.00999999977 : f32
    %6 = vector.broadcast %cst_5 : f32 to vector<16x128xf32>
    %7 = arith.mulf %6, %5 : vector<16x128xf32>
    %8 = arith.maximumf %5, %7 : vector<16x128xf32>
    %9 = arith.truncf %8 : vector<16x128xf32> to vector<16x128xbf16>
    %c0_6 = arith.constant 0 : index
    %c0_7 = arith.constant 0 : index
    %c0_8 = arith.constant 0 : index
    %10 = vector.load %arg4[%c0_6, %c0_7, %c0_8] : memref<3x128x128xbf16, #tpu.memory_space<vmem>>, vector<1x128x128xbf16>
    %11 = vector.shape_cast %10 : vector<1x128x128xbf16> to vector<128x128xbf16>
    %cst_9 = arith.constant dense<0.000000e+00> : vector<16x128xf32>
    %12 = tpu.matmul %9, %11, %cst_9 {dimension_numbers = #tpu.dot_dimension_numbers<[1], [0], [0], [1], [0, 0, 1, 1], [], []>} : vector<16x128xbf16>, vector<128x128xbf16>, vector<16x128xf32> -> vector<16x128xf32>
    %cst_10 = arith.constant 0.00999999977 : f32
    %13 = vector.broadcast %cst_10 : f32 to vector<16x128xf32>
    %14 = arith.mulf %13, %12 : vector<16x128xf32>
    %15 = arith.maximumf %12, %14 : vector<16x128xf32>
    %16 = arith.truncf %15 : vector<16x128xf32> to vector<16x128xbf16>
    %c1 = arith.constant 1 : index
    %c0_11 = arith.constant 0 : index
    %c0_12 = arith.constant 0 : index
    %17 = vector.load %arg4[%c1, %c0_11, %c0_12] : memref<3x128x128xbf16, #tpu.memory_space<vmem>>, vector<1x128x128xbf16>
    %18 = vector.shape_cast %17 : vector<1x128x128xbf16> to vector<128x128xbf16>
    %cst_13 = arith.constant dense<0.000000e+00> : vector<16x128xf32>
    %19 = tpu.matmul %16, %18, %cst_13 {dimension_numbers = #tpu.dot_dimension_numbers<[1], [0], [0], [1], [0, 0, 1, 1], [], []>} : vector<16x128xbf16>, vector<128x128xbf16>, vector<16x128xf32> -> vector<16x128xf32>
    %cst_14 = arith.constant 0.00999999977 : f32
    %20 = vector.broadcast %cst_14 : f32 to vector<16x128xf32>
    %21 = arith.mulf %20, %19 : vector<16x128xf32>
    %22 = arith.maximumf %19, %21 : vector<16x128xf32>
    %23 = arith.truncf %22 : vector<16x128xf32> to vector<16x128xbf16>
    %c2 = arith.constant 2 : index
    %c0_15 = arith.constant 0 : index
    %c0_16 = arith.constant 0 : index
    %24 = vector.load %arg4[%c2, %c0_15, %c0_16] : memref<3x128x128xbf16, #tpu.memory_space<vmem>>, vector<1x128x128xbf16>
    %25 = vector.shape_cast %24 : vector<1x128x128xbf16> to vector<128x128xbf16>
    %cst_17 = arith.constant dense<0.000000e+00> : vector<16x128xf32>
    %26 = tpu.matmul %23, %25, %cst_17 {dimension_numbers = #tpu.dot_dimension_numbers<[1], [0], [0], [1], [0, 0, 1, 1], [], []>} : vector<16x128xbf16>, vector<128x128xbf16>, vector<16x128xf32> -> vector<16x128xf32>
    %27 = vector.extract_strided_slice %26 {offsets = [0, 0], sizes = [16, 1], strides = [1, 1]} : vector<16x128xf32> to vector<16x1xf32>
    %c0_18 = arith.constant 0 : index
    %c0_19 = arith.constant 0 : index
    %28 = vector.load %arg5[%c0_18, %c0_19] : memref<16x1xf32, #tpu.memory_space<vmem>>, vector<16x1xf32>
    tpu.vector_store %arg5[%c0_18, %c0_19], %27 {strides = array<i32>} : memref<16x1xf32, #tpu.memory_space<vmem>>, vector<16x1xf32>,
    return
  }
  func.func @transform_0(%arg0: i32) -> (i32, i32) {
    %c0_i32 = arith.constant 0 : i32
    %c0_i32_0 = arith.constant 0 : i32
    return %arg0, %c0_i32 : i32, i32
  }
  func.func @transform_1(%arg0: i32) -> (i32, i32) {
    %c0_i32 = arith.constant 0 : i32
    %c0_i32_0 = arith.constant 0 : i32
    %c0_i32_1 = arith.constant 0 : i32
    return %c0_i32, %c0_i32_0 : i32, i32
  }
  func.func @transform_2(%arg0: i32) -> (i32, i32) {
    %c0_i32 = arith.constant 0 : i32
    %c0_i32_0 = arith.constant 0 : i32
    %c0_i32_1 = arith.constant 0 : i32
    return %c0_i32, %c0_i32_0 : i32, i32
  }
  func.func @transform_3(%arg0: i32) -> (i32, i32, i32) {
    %c0_i32 = arith.constant 0 : i32
    %c0_i32_0 = arith.constant 0 : i32
    %c0_i32_1 = arith.constant 0 : i32
    %c0_i32_2 = arith.constant 0 : i32
    return %c0_i32, %c0_i32_0, %c0_i32_1 : i32, i32, i32
  }
  func.func @transform_4(%arg0: i32) -> (i32, i32) {
    %c0_i32 = arith.constant 0 : i32
    %c0_i32_0 = arith.constant 0 : i32
    return %arg0, %c0_i32 : i32, i32
  }
}

</mosaic_0001>

<llo_original>
// kernel: forward.1
$region0: #{forward.1}
  #allocation0 [shape = 'u32[]', space=smem, size = 0x4, offset = 0x4, fixed_abs, tag = 'smem constant byte address 0x4 - core index']
  #allocation1 [shape = 'u32[144,128]{1,0:T(1,128)}', space=vmem, size = 0x12000, scoped, tag = 'internal scratch']
  %s0 = inlined_call_operand.vmem [shape: f32[16,8], index: 0, kind: input, shape index: {}]
  %s1 = inlined_call_operand.vmem [shape: f32[8,128], index: 1, kind: input, shape index: {}]
  %s2 = inlined_call_operand.vmem [shape: f32[1,128], index: 2, kind: input, shape index: {}]
  %s3 = inlined_call_operand.hbm [shape: bf16[3,128,128], index: 3, kind: input, shape index: {}]
  %s4 = inlined_call_operand.vmem [shape: f32[16,1], index: 4, kind: output, shape index: {}]
  %s5 = sld [smem:[#allocation0]]
  $region30: #{forward.1} parent=0
    _
  %s7 = ssub.s32 1, %s5
  %s8 = scalar_select 0, %s7, %s5
  $region1: #{forward.1} parent=0
    #allocation2 [shape = 'u8[98304]{0}', space=vmem, size = 0x18000, scoped, tag = 'input window, operand 3, single buffered']
    #allocation3 [shape = 's32[1]{0}', space=sflag, size = 0x4, scoped, tag = 'scoped memory for forward.1']
    %9 = vsyncpa [#allocation3], 0
    // Predicated region
    $region2: #{forward.1} parent=1 // pred_check
      _
    $region3: #{forward.1} parent=1 // pred_check_branch
      %11 = sbr.rel (0) target = $region5
    $region4: #{forward.1} parent=1 // pred_region
      _
    $region5: #{forward.1} parent=1 // pred_fallthru
      _
    // Predicated region
    $region6: #{forward.1} parent=1 // pred_check
      _
    $region7: #{forward.1} parent=1 // pred_check_branch
      %13 = sbr.rel (0) target = $region9
    $region8: #{forward.1} parent=1 // pred_region
      _
    $region9: #{forward.1} parent=1 // pred_fallthru
      _
    // Predicated region
    $region10: #{forward.1} parent=1 // pred_check
      _
    $region11: #{forward.1} parent=1 // pred_check_branch
      %15 = sbr.rel (0) target = $region13
    $region12: #{forward.1} parent=1 // pred_region
      _
    $region13: #{forward.1} parent=1 // pred_fallthru
      _
    // Predicated region
    $region14: #{forward.1} parent=1 // pred_check
      _
    $region15: #{forward.1} parent=1 // pred_check_branch
      %17 = sbr.rel (0) target = $region17
    $region16: #{forward.1} parent=1 // pred_region
      %s19 = ssub.s32 3072, 3072
      %20 = vsyncadd [#allocation3], %s19
      %s21 = sshll.u32 [#allocation2], 4
      %s22 = int_to_ptr.vmem [resolvable:$true] %s21
      %27 = dma.hbm_to_vmem [thread:$0]  %s3, 3072, %s22, [#allocation3], 64, 64, 4
    $region17: #{forward.1} parent=1 // pred_fallthru
      _
    // Predicated region
    $region18: #{forward.1} parent=1 // pred_check
      _
    $region19: #{forward.1} parent=1 // pred_check_branch
      %29 = sbr.rel (0) target = $region21
    $region20: #{forward.1} parent=1 // pred_region
      %30 = dma.done [#allocation3], 3072
    $region21: #{forward.1} parent=1 // pred_fallthru
      _
    %v32 = vld [vmem:[%s0] sm:$0xff]
    %v33 = vld [vmem:[%s0 + $0x8] sm:$0xff]
    %v34 = vld [vmem:[%s1] sm:$0xff]
    %v35 = vld [vmem:[%s2] sm:$0x1]
    %v37 = vlaneseq
    %v38 = vshrl.u32 %v37, 7
    %v39 = vsub.s32 0, %v38
    %v40 = vrot.slane %v35, %v39
    %vm42 = vcmask 64512
    %v44 = vsel %vm42, %v32, 0
    %v47 = vsel %vm42, %v33, 0
    %49 = vmatprep.subr.mxu0 0.0
    %50 = vmatpush1.msra.mxu0 %v34
    %51 = vmatprep.subr.mxu0 0.0
    %52 = vmatpush1.msra.mxu0 0.0
    %53 = vmatprep.subr.mxu0 0.0
    %54 = vmatpush1.msra.mxu0 0.0
    %55 = vmatprep.subr.mxu0 0.0
    %56 = vmatpush1.msra.mxu0 0.0
    %57 = vmatprep.subr.mxu0 0.0
    %58 = vmatpush1.msra.mxu0 0.0
    %59 = vmatprep.subr.mxu0 0.0
    %60 = vmatpush1.msra.mxu0 0.0
    %61 = vmatprep.subr.mxu0 0.0
    %62 = vmatpush1.msra.mxu0 0.0
    %63 = vmatprep.subr.mxu0 0.0
    %64 = vmatpush1.msra.mxu0 0.0
    %65 = vmatprep.subr.mxu0 0.0
    %66 = vmatpush1.msra.mxu0 0.0
    %67 = vmatprep.subr.mxu0 0.0
    %68 = vmatpush1.msra.mxu0 0.0
    %69 = vmatprep.subr.mxu0 0.0
    %70 = vmatpush1.msra.mxu0 0.0
    %71 = vmatprep.subr.mxu0 0.0
    %72 = vmatpush1.msra.mxu0 0.0
    %73 = vmatprep.subr.mxu0 0.0
    %74 = vmatpush1.msra.mxu0 0.0
    %75 = vmatprep.subr.mxu0 0.0
    %76 = vmatpush1.msra.mxu0 0.0
    %77 = vmatprep.subr.mxu0 0.0
    %78 = vmatpush1.msra.mxu0 0.0
    %79 = vmatprep.subr.mxu0 0.0
    %80 = vmatpush1.msra.mxu0 0.0
    %81 = vmatprep.subr.mxu0 0.0
    %82 = vmatpush1.msra.mxu0 0.0
    %83 = vmatprep.subr.mxu0 0.0
    %84 = vmatpush1.msra.mxu0 0.0
    %85 = vmatprep.subr.mxu0 0.0
    %86 = vmatpush1.msra.mxu0 0.0
    %87 = vmatprep.subr.mxu0 0.0
    %88 = vmatpush1.msra.mxu0 0.0
    %89 = vmatprep.subr.mxu0 0.0
    %90 = vmatpush1.msra.mxu0 0.0
    %91 = vmatprep.subr.mxu0 0.0
    %92 = vmatpush1.msra.mxu0 0.0
    %93 = vmatprep.subr.mxu0 0.0
    %94 = vmatpush1.msra.mxu0 0.0
    %95 = vmatprep.subr.mxu0 0.0
    %96 = vmatpush1.msra.mxu0 0.0
    %97 = vmatprep.subr.mxu0 0.0
    %98 = vmatpush1.msra.mxu0 0.0
    %99 = vmatprep.subr.mxu0 0.0
    %100 = vmatpush1.msra.mxu0 0.0
    %101 = vmatprep.subr.mxu0 0.0
    %102 = vmatpush1.msra.mxu0 0.0
    %103 = vmatprep.subr.mxu0 0.0
    %104 = vmatpush1.msra.mxu0 0.0
    %105 = vmatprep.subr.mxu0 0.0
    %106 = vmatpush1.msra.mxu0 0.0
    %107 = vmatprep.subr.mxu0 0.0
    %108 = vmatpush1.msra.mxu0 0.0
    %109 = vmatprep.subr.mxu0 0.0
    %110 = vmatpush1.msra.mxu0 0.0
    %111 = vmatprep.subr.mxu0 0.0
    %112 = vmatpush1.msra.mxu0 0.0
    %113 = vmatprep.mubr.f32.mxu0 0.0
    %114 = vmatmul.mubr.f32.gmra.mrb[0].mxu0 %v44
    %v115 = vpop.f32.mrb[0].mxu0
    %v116 = vadd.f32 %v40, %v115
    %v117 = vpop.f32.mrb[0].mxu0
    %118 = vmatprep.mubr.f32.mxu0 0.0
    %119 = vmatmul.mubr.f32.gmra.mrb[0].mxu0 %v47
    %v120 = vpop.f32.mrb[0].mxu0
    %v121 = vadd.f32 %v40, %v120
    %v122 = vpop.f32.mrb[0].mxu0
    %123 = vdwg.mxu0
    %v124 = vmul.f32 %v116, 0.01
    %v125 = vmul.f32 %v121, 0.01
    %v126 = vmax.f32 %v116, %v124
    %v127 = vmax.f32 %v121, %v125
    %v128 = vpack.c.bf16 %v127, %v126
    %v129 = vld [vmem:[#allocation2] sm:$0xf]
    %v130 = vld [vmem:[#allocation2 + $0x4] sm:$0xf]
    %v131 = vld [vmem:[#allocation2 + $0x8] sm:$0xf]
    %v132 = vld [vmem:[#allocation2 + $0xc] sm:$0xf]
    %v133 = vld [vmem:[#allocation2 + $0x10] sm:$0xf]
    %v134 = vld [vmem:[#allocation2 + $0x14] sm:$0xf]
    %v135 = vld [vmem:[#allocation2 + $0x18] sm:$0xf]
    %v136 = vld [vmem:[#allocation2 + $0x1c] sm:$0xf]
    %v137 = vld [vmem:[#allocation2 + $0x20] sm:$0xf]
    %v138 = vld [vmem:[#allocation2 + $0x24] sm:$0xf]
    %v139 = vld [vmem:[#allocation2 + $0x28] sm:$0xf]
    %v140 = vld [vmem:[#allocation2 + $0x2c] sm:$0xf]
    %v141 = vld [vmem:[#allocation2 + $0x30] sm:$0xf]
    %v142 = vld [vmem:[#allocation2 + $0x34] sm:$0xf]
    %v143 = vld [vmem:[#allocation2 + $0x38] sm:$0xf]
    %v144 = vld [vmem:[#allocation2 + $0x3c] sm:$0xf]
    %v161 = vunpack.c.l.b16 %v129
    %v162 = vunpack.c.l.b16 %v130
    %v163 = vunpack.c.l.b16 %v131
    %v164 = vunpack.c.l.b16 %v132
    %v165 = vunpack.c.l.b16 %v133
    %v166 = vunpack.c.l.b16 %v134
    %v167 = vunpack.c.l.b16 %v135
    %v168 = vunpack.c.l.b16 %v136
    %v169 = vunpack.c.l.b16 %v137
    %v170 = vunpack.c.l.b16 %v138
    %v171 = vunpack.c.l.b16 %v139
    %v172 = vunpack.c.l.b16 %v140
    %v173 = vunpack.c.l.b16 %v141
    %v174 = vunpack.c.l.b16 %v142
    %v175 = vunpack.c.l.b16 %v143
    %v176 = vunpack.c.l.b16 %v144
    %v177 = vpack.c.b16 %v162, %v161
    %v178 = vpack.c.b16 %v164, %v163
    %v179 = vpack.c.b16 %v166, %v165
    %v180 = vpack.c.b16 %v168, %v167
    %v181 = vpack.c.b16 %v170, %v169
    %v182 = vpack.c.b16 %v172, %v171
    %v183 = vpack.c.b16 %v174, %v173
    %v184 = vpack.c.b16 %v176, %v175
    %193 = vmatprep.subr.bf16.mxu0 0
    %194 = vmatpush1.bf16.msra.mxu0 %v177
    %195 = vmatprep.subr.bf16.mxu0 0
    %196 = vmatpush1.bf16.msra.mxu0 %v178
    %197 = vmatprep.subr.bf16.mxu0 0
    %198 = vmatpush1.bf16.msra.mxu0 %v179
    %199 = vmatprep.subr.bf16.mxu0 0
    %200 = vmatpush1.bf16.msra.mxu0 %v180
    %201 = vmatprep.subr.bf16.mxu0 0
    %202 = vmatpush1.bf16.msra.mxu0 %v181
    %203 = vmatprep.subr.bf16.mxu0 0
    %204 = vmatpush1.bf16.msra.mxu0 %v182
    %205 = vmatprep.subr.bf16.mxu0 0
    %206 = vmatpush1.bf16.msra.mxu0 %v183
    %207 = vmatprep.subr.bf16.mxu0 0
    %208 = vmatpush1.bf16.msra.mxu0 %v184
    %209 = vmatprep.subr.bf16.mxu0 0
    %210 = vmatpush1.bf16.msra.mxu0 0
    %211 = vmatprep.subr.bf16.mxu0 0
    %212 = vmatpush1.bf16.msra.mxu0 0
    %213 = vmatprep.subr.bf16.mxu0 0
    %214 = vmatpush1.bf16.msra.mxu0 0
    %215 = vmatprep.subr.bf16.mxu0 0
    %216 = vmatpush1.bf16.msra.mxu0 0
    %217 = vmatprep.subr.bf16.mxu0 0
    %218 = vmatpush1.bf16.msra.mxu0 0
    %219 = vmatprep.subr.bf16.mxu0 0
    %220 = vmatpush1.bf16.msra.mxu0 0
    %221 = vmatprep.subr.bf16.mxu0 0
    %222 = vmatpush1.bf16.msra.mxu0 0
    %223 = vmatprep.subr.bf16.mxu0 0
    %224 = vmatpush1.bf16.msra.mxu0 0
    %225 = vmatprep.mubr.bf16.mxu0 0
    %226 = vmatmul.mubr.bf16.gmra.mrb[0].mxu0 %v128
    %v227 = vpop.f32.mrb[0].mxu0
    %v228 = vadd.f32 0.0, %v227
    %v229 = vpop.f32.mrb[0].mxu0
    %v230 = vpop.f32.mrb[0].mxu0
    %v231 = vadd.f32 0.0, %v230
    %v232 = vpop.f32.mrb[0].mxu0
    %233 = vdwg.mxu0
    %v234 = vmul.f32 %v228, 0.01
    %v235 = vmul.f32 %v231, 0.01
    %v236 = vmax.f32 %v228, %v234
    %v237 = vmax.f32 %v231, %v235
    %v238 = vpack.c.bf16 %v237, %v236
    %s239 = scalar_lea.vmem [#allocation2], 64
    %v240 = vld [vmem:[%s239] sm:$0xf]
    %v241 = vld [vmem:[%s239 + $0x4] sm:$0xf]
    %v242 = vld [vmem:[%s239 + $0x8] sm:$0xf]
    %v243 = vld [vmem:[%s239 + $0xc] sm:$0xf]
    %v244 = vld [vmem:[%s239 + $0x10] sm:$0xf]
    %v245 = vld [vmem:[%s239 + $0x14] sm:$0xf]
    %v246 = vld [vmem:[%s239 + $0x18] sm:$0xf]
    %v247 = vld [vmem:[%s239 + $0x1c] sm:$0xf]
    %v248 = vld [vmem:[%s239 + $0x20] sm:$0xf]
    %v249 = vld [vmem:[%s239 + $0x24] sm:$0xf]
    %v250 = vld [vmem:[%s239 + $0x28] sm:$0xf]
    %v251 = vld [vmem:[%s239 + $0x2c] sm:$0xf]
    %v252 = vld [vmem:[%s239 + $0x30] sm:$0xf]
    %v253 = vld [vmem:[%s239 + $0x34] sm:$0xf]
    %v254 = vld [vmem:[%s239 + $0x38] sm:$0xf]
    %v255 = vld [vmem:[%s239 + $0x3c] sm:$0xf]
    %v272 = vunpack.c.l.b16 %v240
    %v273 = vunpack.c.l.b16 %v241
    %v274 = vunpack.c.l.b16 %v242
    %v275 = vunpack.c.l.b16 %v243
    %v276 = vunpack.c.l.b16 %v244
    %v277 = vunpack.c.l.b16 %v245
    %v278 = vunpack.c.l.b16 %v246
    %v279 = vunpack.c.l.b16 %v247
    %v280 = vunpack.c.l.b16 %v248
    %v281 = vunpack.c.l.b16 %v249
    %v282 = vunpack.c.l.b16 %v250
    %v283 = vunpack.c.l.b16 %v251
    %v284 = vunpack.c.l.b16 %v252
    %v285 = vunpack.c.l.b16 %v253
    %v286 = vunpack.c.l.b16 %v254
    %v287 = vunpack.c.l.b16 %v255
    %v288 = vpack.c.b16 %v273, %v272
    %v289 = vpack.c.b16 %v275, %v274
    %v290 = vpack.c.b16 %v277, %v276
    %v291 = vpack.c.b16 %v279, %v278
    %v292 = vpack.c.b16 %v281, %v280
    %v293 = vpack.c.b16 %v283, %v282
    %v294 = vpack.c.b16 %v285, %v284
    %v295 = vpack.c.b16 %v287, %v286
    %304 = vmatprep.subr.bf16.mxu0 0
    %305 = vmatpush1.bf16.msra.mxu0 %v288
    %306 = vmatprep.subr.bf16.mxu0 0
    %307 = vmatpush1.bf16.msra.mxu0 %v289
    %308 = vmatprep.subr.bf16.mxu0 0
    %309 = vmatpush1.bf16.msra.mxu0 %v290
    %310 = vmatprep.subr.bf16.mxu0 0
    %311 = vmatpush1.bf16.msra.mxu0 %v291
    %312 = vmatprep.subr.bf16.mxu0 0
    %313 = vmatpush1.bf16.msra.mxu0 %v292
    %314 = vmatprep.subr.bf16.mxu0 0
    %315 = vmatpush1.bf16.msra.mxu0 %v293
    %316 = vmatprep.subr.bf16.mxu0 0
    %317 = vmatpush1.bf16.msra.mxu0 %v294
    %318 = vmatprep.subr.bf16.mxu0 0
    %319 = vmatpush1.bf16.msra.mxu0 %v295
    %320 = vmatprep.subr.bf16.mxu0 0
    %321 = vmatpush1.bf16.msra.mxu0 0
    %322 = vmatprep.subr.bf16.mxu0 0
    %323 = vmatpush1.bf16.msra.mxu0 0
    %324 = vmatprep.subr.bf16.mxu0 0
    %325 = vmatpush1.bf16.msra.mxu0 0
    %326 = vmatprep.subr.bf16.mxu0 0
    %327 = vmatpush1.bf16.msra.mxu0 0
    %328 = vmatprep.subr.bf16.mxu0 0
    %329 = vmatpush1.bf16.msra.mxu0 0
    %330 = vmatprep.subr.bf16.mxu0 0
    %331 = vmatpush1.bf16.msra.mxu0 0
    %332 = vmatprep.subr.bf16.mxu0 0
    %333 = vmatpush1.bf16.msra.mxu0 0
    %334 = vmatprep.subr.bf16.mxu0 0
    %335 = vmatpush1.bf16.msra.mxu0 0
    %336 = vmatprep.mubr.bf16.mxu0 0
    %337 = vmatmul.mubr.bf16.gmra.mrb[0].mxu0 %v238
    %v338 = vpop.f32.mrb[0].mxu0
    %v339 = vadd.f32 0.0, %v338
    %v340 = vpop.f32.mrb[0].mxu0
    %v341 = vpop.f32.mrb[0].mxu0
    %v342 = vadd.f32 0.0, %v341
    %v343 = vpop.f32.mrb[0].mxu0
    %344 = vdwg.mxu0
    %v345 = vmul.f32 %v339, 0.01
    %v346 = vmul.f32 %v342, 0.01
    %v347 = vmax.f32 %v339, %v345
    %v348 = vmax.f32 %v342, %v346
    %v349 = vpack.c.bf16 %v348, %v347
    %s350 = scalar_lea.vmem [#allocation2], 128
    %v351 = vld [vmem:[%s350] sm:$0xf]
    %v352 = vld [vmem:[%s350 + $0x4] sm:$0xf]
    %v353 = vld [vmem:[%s350 + $0x8] sm:$0xf]
    %v354 = vld [vmem:[%s350 + $0xc] sm:$0xf]
    %v355 = vld [vmem:[%s350 + $0x10] sm:$0xf]
    %v356 = vld [vmem:[%s350 + $0x14] sm:$0xf]
    %v357 = vld [vmem:[%s350 + $0x18] sm:$0xf]
    %v358 = vld [vmem:[%s350 + $0x1c] sm:$0xf]
    %v359 = vld [vmem:[%s350 + $0x20] sm:$0xf]
    %v360 = vld [vmem:[%s350 + $0x24] sm:$0xf]
    %v361 = vld [vmem:[%s350 + $0x28] sm:$0xf]
    %v362 = vld [vmem:[%s350 + $0x2c] sm:$0xf]
    %v363 = vld [vmem:[%s350 + $0x30] sm:$0xf]
    %v364 = vld [vmem:[%s350 + $0x34] sm:$0xf]
    %v365 = vld [vmem:[%s350 + $0x38] sm:$0xf]
    %v366 = vld [vmem:[%s350 + $0x3c] sm:$0xf]
    %v383 = vunpack.c.l.b16 %v351
    %v384 = vunpack.c.l.b16 %v352
    %v385 = vunpack.c.l.b16 %v353
    %v386 = vunpack.c.l.b16 %v354
    %v387 = vunpack.c.l.b16 %v355
    %v388 = vunpack.c.l.b16 %v356
    %v389 = vunpack.c.l.b16 %v357
    %v390 = vunpack.c.l.b16 %v358
    %v391 = vunpack.c.l.b16 %v359
    %v392 = vunpack.c.l.b16 %v360
    %v393 = vunpack.c.l.b16 %v361
    %v394 = vunpack.c.l.b16 %v362
    %v395 = vunpack.c.l.b16 %v363
    %v396 = vunpack.c.l.b16 %v364
    %v397 = vunpack.c.l.b16 %v365
    %v398 = vunpack.c.l.b16 %v366
    %v399 = vpack.c.b16 %v384, %v383
    %v400 = vpack.c.b16 %v386, %v385
    %v401 = vpack.c.b16 %v388, %v387
    %v402 = vpack.c.b16 %v390, %v389
    %v403 = vpack.c.b16 %v392, %v391
    %v404 = vpack.c.b16 %v394, %v393
    %v405 = vpack.c.b16 %v396, %v395
    %v406 = vpack.c.b16 %v398, %v397
    %415 = vmatprep.subr.bf16.mxu0 0
    %416 = vmatpush1.bf16.msra.mxu0 %v399
    %417 = vmatprep.subr.bf16.mxu0 0
    %418 = vmatpush1.bf16.msra.mxu0 %v400
    %419 = vmatprep.subr.bf16.mxu0 0
    %420 = vmatpush1.bf16.msra.mxu0 %v401
    %421 = vmatprep.subr.bf16.mxu0 0
    %422 = vmatpush1.bf16.msra.mxu0 %v402
    %423 = vmatprep.subr.bf16.mxu0 0
    %424 = vmatpush1.bf16.msra.mxu0 %v403
    %425 = vmatprep.subr.bf16.mxu0 0
    %426 = vmatpush1.bf16.msra.mxu0 %v404
    %427 = vmatprep.subr.bf16.mxu0 0
    %428 = vmatpush1.bf16.msra.mxu0 %v405
    %429 = vmatprep.subr.bf16.mxu0 0
    %430 = vmatpush1.bf16.msra.mxu0 %v406
    %431 = vmatprep.subr.bf16.mxu0 0
    %432 = vmatpush1.bf16.msra.mxu0 0
    %433 = vmatprep.subr.bf16.mxu0 0
    %434 = vmatpush1.bf16.msra.mxu0 0
    %435 = vmatprep.subr.bf16.mxu0 0
    %436 = vmatpush1.bf16.msra.mxu0 0
    %437 = vmatprep.subr.bf16.mxu0 0
    %438 = vmatpush1.bf16.msra.mxu0 0
    %439 = vmatprep.subr.bf16.mxu0 0
    %440 = vmatpush1.bf16.msra.mxu0 0
    %441 = vmatprep.subr.bf16.mxu0 0
    %442 = vmatpush1.bf16.msra.mxu0 0
    %443 = vmatprep.subr.bf16.mxu0 0
    %444 = vmatpush1.bf16.msra.mxu0 0
    %445 = vmatprep.subr.bf16.mxu0 0
    %446 = vmatpush1.bf16.msra.mxu0 0
    %447 = vmatprep.mubr.bf16.mxu0 0
    %448 = vmatmul.mubr.bf16.gmra.mrb[0].mxu0 %v349
    %v449 = vpop.f32.mrb[0].mxu0
    %v450 = vadd.f32 0.0, %v449
    %v451 = vpop.f32.mrb[0].mxu0
    %v452 = vpop.f32.mrb[0].mxu0
    %v453 = vadd.f32 0.0, %v452
    %v454 = vpop.f32.mrb[0].mxu0
    %455 = vdwg.mxu0
    %vm456 = vcmask 7168
    %457 = vst.msk [vmem:[%s4] sm:$0xff] %vm456, %v450
    %458 = vst.msk [vmem:[%s4 + $0x8] sm:$0xff] %vm456, %v453
    // Predicated region
    $region22: #{forward.1} parent=1 // pred_check
      _
    $region23: #{forward.1} parent=1 // pred_check_branch
      %460 = sbr.rel (0) target = $region25
    $region24: #{forward.1} parent=1 // pred_region
      _
    $region25: #{forward.1} parent=1 // pred_fallthru
      _
    // Predicated region
    $region26: #{forward.1} parent=1 // pred_check
      _
    $region27: #{forward.1} parent=1 // pred_check_branch
      %462 = sbr.rel (0) target = $region29
    $region28: #{forward.1} parent=1 // pred_region
      _
    $region29: #{forward.1} parent=1 // pred_fallthru
      _
    %463 = vsyncpa [#allocation3], 1

</llo_original>
